<compile_context>
chip_gen: v7x
topology: tpu7x:2x2x1
jax: 0.10.0
libtpu: 0.0.40
codegen_flags: <defaults>
</compile_context>

<pallas_src>
import math

import jax
import jax.numpy as jnp
from jax.experimental import pallas as pl
from jax.experimental.pallas import tpu as pltpu

EPS = 1e-5

# dtype streamed into the MXU.  Accumulation is always f32
# (preferred_element_type); BN+ReLU stays f32 on the VPU (v5e has no bf16 VPU).
MATMUL_DTYPE = jnp.bfloat16


def _round_up(x, m):
    return (x + m - 1) // m * m


# ---------------------------------------------------------------------------
# Fused kernel: one row-tile of  HaarLLpool( conv1x1( relu( bn1(x) ) ) )
#
#   x_ref : (th, 2, Wo, 2*Cin)  th pooled output rows; axis 1 holds the two
#           source image rows of each output row; the W-direction 2-pixel
#           window is folded (contiguously, for free) into the channel-minor
#           axis (2*Cin).
#   s_ref : (1, 2*Cin)   folded 0.5 * BN scale (tiled over the W pair)
#   b_ref : (1, 2*Cin)   folded 0.5 * BN bias  (tiled over the W pair)
#   w_ref : (2*Cin, Cout) [W1; W1] in MATMUL_DTYPE
#   o_ref : (th*Wo, Cout) f32, channel-minor (NHWC-ordered) output rows
# ---------------------------------------------------------------------------
def transition_kernel(x_ref, s_ref, b_ref, w_ref, o_ref):
    x = x_ref[...]
    # 0.5*relu(bn(x)) == relu(0.5*bn(x))  (0.5 > 0), so the Haar LL 0.5 scale
    # is folded into the BN affine.  All f32, VPU.
    a = jnp.maximum(x * s_ref[...] + b_ref[...], 0.0)        # (th, 2, Wo, 2C)
    # H-direction half of the 2x2 pool: slab add, no lane/sublane crossing.
    ap = a[:, 0] + a[:, 1]                                    # (th, Wo, 2C)
    th, wo, k = ap.shape
    # W-direction half of the pool rides the matmul contraction (weight is
    # stacked [W1; W1]); downcast to bf16 only here, accumulate in f32.
    ap2 = ap.reshape(th * wo, k).astype(w_ref.dtype)
    o_ref[...] = jnp.dot(ap2, w_ref[...], preferred_element_type=jnp.float32)


# ---------------------------------------------------------------------------
# Wrappers
# ---------------------------------------------------------------------------
def _fold_bn(gamma, beta, mean, var):
    scale = gamma / jnp.sqrt(var + EPS)
    return scale, beta - mean * scale


@jax.jit
def transition_block_nhwc(x_nhwc, params):
    """NHWC-native fused TransitionBlock.  Preferred entry point: no layout
    passes — one HBM read of x, one HBM write of the pooled output."""
    g1, be1, m1, v1, w1_ic = params                    # w1_ic: (Cin, Cout)
    N, H, W, Cin = x_nhwc.shape
    Cout = w1_ic.shape[1]
    assert H % 2 == 0 and W % 2 == 0, "Haar pool needs even spatial dims"
    Ho, Wo = H // 2, W // 2
    K = 2 * Cin                                        # W-pair folded into K

    # --- tiny per-call parameter packing (0.5 pool scale folded into BN) ----
    s1, b1 = _fold_bn(g1, be1, m1, v1)
    s_t = jnp.tile(0.5 * s1, 2).reshape(1, K).astype(jnp.float32)
    b_t = jnp.tile(0.5 * b1, 2).reshape(1, K).astype(jnp.float32)
    w2 = jnp.concatenate([w1_ic, w1_ic], axis=0).astype(MATMUL_DTYPE)  # (K, Cout)

    # --- FREE contiguous reshape; the 2x2 window gather is done by the
    #     BlockSpec (two source rows per output row), not by XLA. ------------
    rows = N * Ho
    x4 = x_nhwc.reshape(rows, 2, Wo, K)

    # --- row-tile selection: ~4 MiB padded-VMEM blocks, grid >= 2 when
    #     possible (megacore split + pipeline overlap). ----------------------
    itemsize = x_nhwc.dtype.itemsize
    in_row = 2 * _round_up(Wo, 8) * _round_up(K, 128) * itemsize    # VMEM bytes/row
    out_row = Wo * _round_up(Cout, 128) * 4
    budget = 4 * 1024 * 1024
    th = max(1, min(rows, budget // (in_row + out_row)))
    if th == rows and rows >= 2:
        th = (rows + 1) // 2
    # keep the output block's sublane count (th*Wo) a multiple of 8
    th = _round_up(th, 8 // math.gcd(8, Wo))
    grid = pl.cdiv(rows, th)
    rows_p = grid * th
    if rows_p != rows:
        # padded rows produce garbage (relu(bias) @ W); they are sliced off below
        x4 = jnp.pad(x4, ((0, rows_p - rows), (0, 0), (0, 0), (0, 0)))

    out2d = pl.pallas_call(
        transition_kernel,
        out_shape=jax.ShapeDtypeStruct((rows_p * Wo, Cout), jnp.float32),
        grid=(grid,),
        in_specs=[
            pl.BlockSpec((th, 2, Wo, K), lambda i: (i, 0, 0, 0)),  # activation rows
            pl.BlockSpec((1, K), lambda i: (0, 0)),                # bn scale (resident)
            pl.BlockSpec((1, K), lambda i: (0, 0)),                # bn bias  (resident)
            pl.BlockSpec((K, Cout), lambda i: (0, 0)),             # weight   (resident)
        ],
        out_specs=pl.BlockSpec((th * Wo, Cout), lambda i: (i, 0)),
        compiler_params=pltpu.CompilerParams(
            dimension_semantics=("parallel",),       # megacore / v7x 2-TC split
            vmem_limit_bytes=48 * 1024 * 1024),      # < v7x 64 MiB physical
    )(x4, s_t, b_t, w2)

    if rows_p != rows:
        out2d = out2d[: rows * Wo]
    return out2d.reshape(N, Ho, Wo, Cout)             # free reshape, NHWC


@jax.jit
def transition_block(x_nchw, params):
    """PyTorch-layout-parity wrapper (NCHW in / NCHW out).  The two transposes
    are boundary conversions only; an NHWC network should call
    transition_block_nhwc directly and skip both HBM passes."""
    x_nhwc = jnp.transpose(x_nchw, (0, 2, 3, 1))
    out = transition_block_nhwc(x_nhwc, params)
    return jnp.transpose(out, (0, 3, 1, 2))


# ---------------------------------------------------------------------------
# Pure-JAX reference (NCHW, eval-mode BN; Haar wavelet pool = LL band)
# ---------------------------------------------------------------------------
def reference(x, params):
    g1, be1, m1, v1, w1_ic = params
    sh = (1, -1, 1, 1)
    a = jax.nn.relu((x - m1.reshape(sh)) * (g1.reshape(sh)
                                            / jnp.sqrt(v1.reshape(sh) + EPS))
                    + be1.reshape(sh))
    h = jnp.einsum('nchw,co->nohw', a, w1_ic)          # 1x1 conv, bias=False
    Nb, C, H, W = h.shape
    hb = h.reshape(Nb, C, H // 2, 2, W // 2, 2)
    return hb.sum(axis=(3, 5)) * 0.5                   # Haar LL pool


# ---------------------------------------------------------------------------
def make_params(key, in_planes, out_planes):
    ks = jax.random.split(key, 5)
    g1 = 1.0 + 0.1 * jax.random.normal(ks[0], (in_planes,), jnp.float32)
    be1 = 0.1 * jax.random.normal(ks[1], (in_planes,), jnp.float32)
    m1 = 0.1 * jax.random.normal(ks[2], (in_planes,), jnp.float32)
    v1 = jax.random.uniform(ks[3], (in_planes,), jnp.float32, 0.5, 1.5)
    w1_ic = (jax.random.normal(ks[4], (in_planes, out_planes), jnp.float32)
             * (2.0 / in_planes) ** 0.5)               # (Cin, Cout)
    return (g1, be1, m1, v1, w1_ic)


if __name__ == "__main__":
    key = jax.random.PRNGKey(0)
    kx, kp = jax.random.split(key)

    in_planes, out_planes = 4, 8
    N, H, W = 2, 16, 16
    x = jax.random.normal(kx, (N, in_planes, H, W), jnp.float32)   # NCHW
    params = make_params(kp, in_planes, out_planes)

    out = jax.block_until_ready(transition_block(x, params))
    ref = reference(x, params)

    assert out.shape == (N, out_planes, H // 2, W // 2), out.shape
    err = float(jnp.max(jnp.abs(out - ref)))
    # bf16 MXU operands -> loosened tolerance (f32 accumulation keeps it small)
    tol = 5e-2 if MATMUL_DTYPE == jnp.bfloat16 else 1e-3
    assert err <= tol, f"max abs err {err} > {tol}"

    print("KERNEL_OK")
</pallas_src>

<mosaic_0001>
module attributes {stable_mosaic.version = 11 : i64} {
  func.func @transition_kernel(%arg0: i32, %arg1: memref<8x2x8x8xf32, #tpu.memory_space<vmem>>, %arg2: memref<1x8xf32, #tpu.memory_space<vmem>>, %arg3: memref<1x8xf32, #tpu.memory_space<vmem>>, %arg4: memref<8x8xbf16, #tpu.memory_space<vmem>>, %arg5: memref<64x8xf32, #tpu.memory_space<vmem>>) attributes {dimension_semantics = [#tpu.dimension_semantics<parallel>], iteration_bounds = array<i64: 2>, scalar_prefetch = 0 : i64, scratch_operands = 0 : i64, tpu.core_type = #tpu.core_type<tc>, window_params = [{transform_indices = @transform_0, window_bounds = array<i64: 8, 2, 8, 8>}, {pipeline_mode = #tpu.pipeline_mode<synchronous>, transform_indices = @transform_1, window_bounds = array<i64: 1, 8>}, {pipeline_mode = #tpu.pipeline_mode<synchronous>, transform_indices = @transform_2, window_bounds = array<i64: 1, 8>}, {pipeline_mode = #tpu.pipeline_mode<synchronous>, transform_indices = @transform_3, window_bounds = array<i64: 8, 8>}, {transform_indices = @transform_4, window_bounds = array<i64: 64, 8>}]} {
    %c0 = arith.constant 0 : index
    %c0_0 = arith.constant 0 : index
    %c0_1 = arith.constant 0 : index
    %c0_2 = arith.constant 0 : index
    %0 = vector.load %arg1[%c0, %c0_0, %c0_1, %c0_2] : memref<8x2x8x8xf32, #tpu.memory_space<vmem>>, vector<8x2x8x8xf32>
    %c0_3 = arith.constant 0 : index
    %c0_4 = arith.constant 0 : index
    %1 = vector.load %arg2[%c0_3, %c0_4] : memref<1x8xf32, #tpu.memory_space<vmem>>, vector<1x8xf32>
    %2 = vector.shape_cast %1 : vector<1x8xf32> to vector<1x1x1x8xf32>
    %3 = vector.broadcast %2 : vector<1x1x1x8xf32> to vector<8x2x8x8xf32>
    %4 = arith.mulf %0, %3 : vector<8x2x8x8xf32>
    %c0_5 = arith.constant 0 : index
    %c0_6 = arith.constant 0 : index
    %5 = vector.load %arg3[%c0_5, %c0_6] : memref<1x8xf32, #tpu.memory_space<vmem>>, vector<1x8xf32>
    %6 = vector.shape_cast %5 : vector<1x8xf32> to vector<1x1x1x8xf32>
    %7 = vector.broadcast %6 : vector<1x1x1x8xf32> to vector<8x2x8x8xf32>
    %8 = arith.addf %4, %7 : vector<8x2x8x8xf32>
    %cst = arith.constant 0.000000e+00 : f32
    %9 = vector.broadcast %cst : f32 to vector<8x2x8x8xf32>
    %10 = arith.maximumf %8, %9 : vector<8x2x8x8xf32>
    %11 = vector.extract_strided_slice %10 {offsets = [0, 0, 0, 0], sizes = [8, 1, 8, 8], strides = [1, 1, 1, 1]} : vector<8x2x8x8xf32> to vector<8x1x8x8xf32>
    %12 = vector.shape_cast %11 : vector<8x1x8x8xf32> to vector<8x8x8xf32>
    %13 = vector.extract_strided_slice %10 {offsets = [0, 1, 0, 0], sizes = [8, 1, 8, 8], strides = [1, 1, 1, 1]} : vector<8x2x8x8xf32> to vector<8x1x8x8xf32>
    %14 = vector.shape_cast %13 : vector<8x1x8x8xf32> to vector<8x8x8xf32>
    %15 = arith.addf %12, %14 : vector<8x8x8xf32>
    %16 = vector.shape_cast %15 : vector<8x8x8xf32> to vector<64x8xf32>
    %17 = arith.truncf %16 : vector<64x8xf32> to vector<64x8xbf16>
    %c0_7 = arith.constant 0 : index
    %c0_8 = arith.constant 0 : index
    %18 = vector.load %arg4[%c0_7, %c0_8] : memref<8x8xbf16, #tpu.memory_space<vmem>>, vector<8x8xbf16>
    %cst_9 = arith.constant dense<0.000000e+00> : vector<64x8xf32>
    %19 = tpu.matmul %17, %18, %cst_9 {dimension_numbers = #tpu.dot_dimension_numbers<[1], [0], [0], [1], [0, 0, 1, 1], [], []>} : vector<64x8xbf16>, vector<8x8xbf16>, vector<64x8xf32> -> vector<64x8xf32>
    %c0_10 = arith.constant 0 : index
    %c0_11 = arith.constant 0 : index
    %20 = vector.load %arg5[%c0_10, %c0_11] : memref<64x8xf32, #tpu.memory_space<vmem>>, vector<64x8xf32>
    tpu.vector_store %arg5[%c0_10, %c0_11], %19 {strides = array<i32>} : memref<64x8xf32, #tpu.memory_space<vmem>>, vector<64x8xf32>,
    return
  }
  func.func @transform_0(%arg0: i32) -> (i32, i32, i32, i32) {
    %c0_i32 = arith.constant 0 : i32
    %c0_i32_0 = arith.constant 0 : i32
    %c0_i32_1 = arith.constant 0 : i32
    %c0_i32_2 = arith.constant 0 : i32
    return %arg0, %c0_i32, %c0_i32_0, %c0_i32_1 : i32, i32, i32, i32
  }
  func.func @transform_1(%arg0: i32) -> (i32, i32) {
    %c0_i32 = arith.constant 0 : i32
    %c0_i32_0 = arith.constant 0 : i32
    %c0_i32_1 = arith.constant 0 : i32
    return %c0_i32, %c0_i32_0 : i32, i32
  }
  func.func @transform_2(%arg0: i32) -> (i32, i32) {
    %c0_i32 = arith.constant 0 : i32
    %c0_i32_0 = arith.constant 0 : i32
    %c0_i32_1 = arith.constant 0 : i32
    return %c0_i32, %c0_i32_0 : i32, i32
  }
  func.func @transform_3(%arg0: i32) -> (i32, i32) {
    %c0_i32 = arith.constant 0 : i32
    %c0_i32_0 = arith.constant 0 : i32
    %c0_i32_1 = arith.constant 0 : i32
    return %c0_i32, %c0_i32_0 : i32, i32
  }
  func.func @transform_4(%arg0: i32) -> (i32, i32) {
    %c0_i32 = arith.constant 0 : i32
    %c0_i32_0 = arith.constant 0 : i32
    return %arg0, %c0_i32 : i32, i32
  }
}

</mosaic_0001>

<llo_original>
// kernel: tile.13
$region0: #{tile.13}
  #allocation0 [shape = 's32[1]{0}', space=sflag, size = 0x4, scoped, tag = 'scoped memory for tile.13']
  %s0 = inlined_call_operand.vmem [shape: f32[4], index: 0, kind: input, shape index: {}]
  %s1 = inlined_call_operand.vmem [shape: f32[2,4], index: 1, kind: output, shape index: {}]
  // Predicated region
  $region2: #{tile.13} parent=0 // pred_check
    _
  $region3: #{tile.13} parent=0 // pred_check_branch
    %3 = sbr.rel (0) target = $region5
  $region4: #{tile.13} parent=0 // pred_region
    _
  $region5: #{tile.13} parent=0 // pred_fallthru
    _
  %v4 = vld [vmem:[%s0] ss:$0 sm:$0xff]
  %5 = vst [vmem:[%s1] sm:$0x3] %v4

// kernel: tile.14
$region0: #{tile.14}
  %s0 = inlined_call_operand.vmem [shape: f32[2,4], index: 0, kind: input, shape index: {}]
  %s1 = inlined_call_operand.vmem [shape: f32[1,8], index: 1, kind: output, shape index: {}]
  $region1: #{tile.14} parent=0
    #allocation0 [shape = 'u8[4096]{0}', space=vmem, size = 0x1000, scoped, tag = 'scoped mem for output reshape']
    #allocation1 [shape = 'u8[4096]{0}', space=vmem, size = 0x1000, scoped, tag = 'scoped mem for input reshape']
    %s3 = sshllo.u32 0, 2
    %v4 = vld [vmem:[%s0] sm:%s3]
    %5 = vst [vmem:[#allocation1] sm:%s3] %v4
    %v6 = vld [vmem:[#allocation1] sm:$0x1]
    %vm7 = vcmask 31744
    %8 = vst.msk [vmem:[#allocation0] sm:$0x1] %vm7, %v6
    %s9 = scalar_lea.vmem [#allocation1], 1
    %v10 = vld [vmem:[%s9] sm:$0x1]
    %11 = vrot.lane.b32.xlu0 %v10, 4
    %v12 = vpop.permute.xlu0 %11
    %vm13 = vcmask 64544
    %14 = vst.msk [vmem:[#allocation0] sm:$0x1] %vm13, %v12
    %s16 = sshllo.u32 0, 1
    %v18 = vld [vmem:[#allocation0] sm:%s16]
    %s19 = sshllo.u32 0, 1
    %20 = vst [vmem:[%s1] sm:%s19] %v18

// kernel: transition_block_nhwc.1
$region0: #{transition_block_nhwc.1}
  #allocation0 [shape = 'u32[]', space=smem, size = 0x4, offset = 0x4, fixed_abs, tag = 'smem constant byte address 0x4 - core index']
  #allocation1 [shape = 'u32[144,128]{1,0:T(1,128)}', space=vmem, size = 0x12000, scoped, tag = 'internal scratch']
  %s0 = inlined_call_operand.vmem [shape: f32[16,2,8,8], index: 0, kind: input, shape index: {}]
  %s1 = inlined_call_operand.vmem [shape: f32[1,8], index: 1, kind: input, shape index: {}]
  %s2 = inlined_call_operand.vmem [shape: f32[1,8], index: 2, kind: input, shape index: {}]
  %s3 = inlined_call_operand.vmem [shape: bf16[8,8], index: 3, kind: input, shape index: {}]
  %s4 = inlined_call_operand.hbm [shape: f32[128,8], index: 4, kind: output, shape index: {}]
  %s5 = sld [smem:[#allocation0]]
  $region49: #{transition_block_nhwc.1} parent=0
    _
  %s7 = ssub.s32 1, %s5
  %s8 = scalar_select 0, %s7, %s5
  $region1: #{transition_block_nhwc.1} parent=0
    #allocation2 [shape = 'u8[65536]{0}', space=vmem, size = 0x10000, scoped, tag = 'output window, operand 0']
    #allocation3 [shape = 's32[2]{0}', space=sflag, size = 0x8, scoped, tag = 'scoped memory for transition_block_nhwc.1']
    %9 = vsyncpa [#allocation3], 0
    %s10 = scalar_lea.sflag [#allocation3], 1
    %11 = vsyncpa %s10, 0
    loop: start=0, step=1, limit=4
    $region2: #{transition_block_nhwc.1} parent=1 // loop_pre_header
      _
    $region3: #{transition_block_nhwc.1} parent=1 // loop_header
      %s13 = sphi 0, %s17
      %p14 = scmp.ge.s32.totalorder %s13, 4
      %s23 = sphi 0, %s25
      %s26 = sphi 0, %s23
      %s27 = sphi 0, %s26
      %s43 = sphi 0, %s27
      %s47 = sphi 0, %s47
      %s49 = sphi 0, %s47
      %s50 = sphi 0, %s49
      %s64 = sphi 0, %s50
      %s68 = sphi 0, %s68
      %s70 = sphi 0, %s68
      %s71 = sphi 0, %s70
      %s85 = sphi 0, %s71
      %s89 = sphi 0, %s89
      %s91 = sphi 0, %s89
      %s92 = sphi 0, %s91
      %s106 = sphi 0, %s92
      %s112 = sphi 0, %s114
      %s115 = sphi 0, %s112
      %s116 = sphi 0, %s115
      %s132 = sphi 0, %s116
    $region4: #{transition_block_nhwc.1} parent=1 // loop_header_branch
      %16 = sbr.rel (%p14) target = $region8
    $region5: #{transition_block_nhwc.1} parent=1 // loop_body
      %s18 = ssub.s32 %s13, 1
      %s19 = ssub.s32 %s13, 2
      %s20 = sadd.s32 %s13, 1
      %s21 = ssub.s32 %s13, %s20
      %p22 = scmp.eq.s32.totalorder %s21, 0
      %s24 = sadd.s32 %s23, 1
      %s25 = scalar_select %p22, %s23, %s24
      %p28 = pneg %p22
      %p29 = scmp.eq.s32.totalorder %s13, 1
      %p30 = por %p28, %p29
      %p31 = scmp.ne.s32.totalorder %s23, %s26
      %p32 = scmp.eq.s32.totalorder %s13, 0
      %p33 = por %p31, %p32
      %p34 = scmp.ne.s32.totalorder %s23, %s26
      %p35 = scmp.eq.s32.totalorder %s18, 1
      %p36 = por %p34, %p35
      %p37 = scmp.ne.s32.totalorder %s26, %s27
      %p38 = scmp.eq.s32.totalorder %s18, 0
      %p39 = por %p37, %p38
      %p40 = scmp.ne.s32.totalorder %s26, %s27
      %p41 = scmp.eq.s32.totalorder %s19, 1
      %p42 = por %p40, %p41
      %p44 = scmp.ne.s32.totalorder %s27, %s43
      %p45 = scmp.eq.s32.totalorder %s19, 0
      %p46 = por %p44, %p45
      %s48 = sadd.s32 %s47, 1
      %p51 = scmp.eq.s32.totalorder %s13, 1
      %p52 = scmp.ne.s32.totalorder %s47, %s49
      %p53 = scmp.eq.s32.totalorder %s13, 0
      %p54 = por %p52, %p53
      %p55 = scmp.ne.s32.totalorder %s47, %s49
      %p56 = scmp.eq.s32.totalorder %s18, 1
      %p57 = por %p55, %p56
      %p58 = scmp.ne.s32.totalorder %s49, %s50
      %p59 = scmp.eq.s32.totalorder %s18, 0
      %p60 = por %p58, %p59
      %p61 = scmp.ne.s32.totalorder %s49, %s50
      %p62 = scmp.eq.s32.totalorder %s19, 1
      %p63 = por %p61, %p62
      %p65 = scmp.ne.s32.totalorder %s50, %s64
      %p66 = scmp.eq.s32.totalorder %s19, 0
      %p67 = por %p65, %p66
      %s69 = sadd.s32 %s68, 1
      %p72 = scmp.eq.s32.totalorder %s13, 1
      %p73 = scmp.ne.s32.totalorder %s68, %s70
      %p74 = scmp.eq.s32.totalorder %s13, 0
      %p75 = por %p73, %p74
      %p76 = scmp.ne.s32.totalorder %s68, %s70
      %p77 = scmp.eq.s32.totalorder %s18, 1
      %p78 = por %p76, %p77
      %p79 = scmp.ne.s32.totalorder %s70, %s71
      %p80 = scmp.eq.s32.totalorder %s18, 0
      %p81 = por %p79, %p80
      %p82 = scmp.ne.s32.totalorder %s70, %s71
      %p83 = scmp.eq.s32.totalorder %s19, 1
      %p84 = por %p82, %p83
      %p86 = scmp.ne.s32.totalorder %s71, %s85
      %p87 = scmp.eq.s32.totalorder %s19, 0
      %p88 = por %p86, %p87
      %s90 = sadd.s32 %s89, 1
      %p93 = scmp.eq.s32.totalorder %s13, 1
      %p94 = scmp.ne.s32.totalorder %s89, %s91
      %p95 = scmp.eq.s32.totalorder %s13, 0
      %p96 = por %p94, %p95
      %p97 = scmp.ne.s32.totalorder %s89, %s91
      %p98 = scmp.eq.s32.totalorder %s18, 1
      %p99 = por %p97, %p98
      %p100 = scmp.ne.s32.totalorder %s91, %s92
      %p101 = scmp.eq.s32.totalorder %s18, 0
      %p102 = por %p100, %p101
      %p103 = scmp.ne.s32.totalorder %s91, %s92
      %p104 = scmp.eq.s32.totalorder %s19, 1
      %p105 = por %p103, %p104
      %p107 = scmp.ne.s32.totalorder %s92, %s106
      %p108 = scmp.eq.s32.totalorder %s19, 0
      %p109 = por %p107, %p108
      %s110 = ssub.s32 %s13, %s20
      %p111 = scmp.eq.s32.totalorder %s110, 0
      %s113 = sadd.s32 %s112, 1
      %s114 = scalar_select %p111, %s112, %s113
      %p117 = pneg %p111
      %p118 = scmp.eq.s32.totalorder %s13, 1
      %p119 = por %p117, %p118
      %p120 = scmp.ne.s32.totalorder %s112, %s115
      %p121 = scmp.eq.s32.totalorder %s13, 0
      %p122 = por %p120, %p121
      %p123 = scmp.ne.s32.totalorder %s112, %s115
      %p124 = scmp.eq.s32.totalorder %s18, 1
      %p125 = por %p123, %p124
      %p126 = scmp.ne.s32.totalorder %s115, %s116
      %p127 = scmp.eq.s32.totalorder %s18, 0
      %p128 = por %p126, %p127
      %p129 = scmp.ne.s32.totalorder %s115, %s116
      %p130 = scmp.eq.s32.totalorder %s19, 1
      %p131 = por %p129, %p130
      %p133 = scmp.ne.s32.totalorder %s116, %s132
      %p134 = scmp.eq.s32.totalorder %s19, 0
      %p135 = por %p133, %p134
      %p136 = scmp.le.s32.totalorder 1, %s13
      %p137 = scmp.lt.s32.totalorder %s13, 3
      %p138 = pnand %p136, %p137
      %p139 = pneg %p138
      // Predicated region
      $region9: #{transition_block_nhwc.1} parent=5 // pred_check
        _
      $region10: #{transition_block_nhwc.1} parent=5 // pred_check_branch
        %141 = sbr.rel (%p138) target = $region12
      $region11: #{transition_block_nhwc.1} parent=5 // pred_region
        %s142 = ssub.s32 %s13, 1
        // Predicated region
        $region13: #{transition_block_nhwc.1} parent=11 // pred_check
          %p143 = pneg %p60
        $region14: #{transition_block_nhwc.1} parent=11 // pred_check_branch
          %145 = sbr.rel (%p143) target = $region16
        $region15: #{transition_block_nhwc.1} parent=11 // pred_region
          _
        $region16: #{transition_block_nhwc.1} parent=11 // pred_fallthru
          _
        // Predicated region
        $region17: #{transition_block_nhwc.1} parent=11 // pred_check
          %p146 = pneg %p81
        $region18: #{transition_block_nhwc.1} parent=11 // pred_check_branch
          %148 = sbr.rel (%p146) target = $region20
        $region19: #{transition_block_nhwc.1} parent=11 // pred_region
          _
        $region20: #{transition_block_nhwc.1} parent=11 // pred_fallthru
          _
        // Predicated region
        $region21: #{transition_block_nhwc.1} parent=11 // pred_check
          %p149 = pneg %p102
        $region22: #{transition_block_nhwc.1} parent=11 // pred_check_branch
          %151 = sbr.rel (%p149) target = $region24
        $region23: #{transition_block_nhwc.1} parent=11 // pred_region
          _
        $region24: #{transition_block_nhwc.1} parent=11 // pred_fallthru
          _
      $region12: #{transition_block_nhwc.1} parent=5 // pred_fallthru
        _
      %p152 = scmp.lt.s32.totalorder %s13, 2
      // Predicated region
      $region25: #{transition_block_nhwc.1} parent=5 // pred_check
        %p153 = pneg %p152
      $region26: #{transition_block_nhwc.1} parent=5 // pred_check_branch
        %155 = sbr.rel (%p153) target = $region28
      $region27: #{transition_block_nhwc.1} parent=5 // pred_region
        // Predicated region
        $region29: #{transition_block_nhwc.1} parent=27 // pred_check
          %p156 = pneg %p33
        $region30: #{transition_block_nhwc.1} parent=27 // pred_check_branch
          %158 = sbr.rel (%p156) target = $region32
        $region31: #{transition_block_nhwc.1} parent=27 // pred_region
          %s159 = smul.u32 8, %s13
          %p160 = scmp.lt.s32.totalorder %s159, 15
          %s161 = scalar_select %p160, %s159, 15
          %s162 = smul.addr %s161, 2
          %s163 = smul.addr %s162, 8
          %s164 = scalar_lea.vmem %s0, %s163
          %s165 = smul.u32 8, %s13
        $region32: #{transition_block_nhwc.1} parent=27 // pred_fallthru
          _
      $region28: #{transition_block_nhwc.1} parent=5 // pred_fallthru
        _
      %p166 = scmp.le.s32.totalorder 1, %s13
      %p167 = scmp.lt.s32.totalorder %s13, 3
      %p168 = pnand %p166, %p167
      %p169 = pneg %p168
      // Predicated region
      $region33: #{transition_block_nhwc.1} parent=5 // pred_check
        _
      $region34: #{transition_block_nhwc.1} parent=5 // pred_check_branch
        %171 = sbr.rel (%p168) target = $region36
      $region35: #{transition_block_nhwc.1} parent=5 // pred_region
        %s172 = ssub.s32 %s13, 1
        %s173 = smul.u32 8, %s18
        %p174 = scmp.lt.s32.totalorder %s173, 15
        %s175 = scalar_select %p174, %s173, 15
        %s176 = smul.addr %s175, 2
        %s177 = smul.addr %s176, 8
        %s178 = scalar_lea.vmem %s0, %s177
        %p179 = pneg %p39
        %p180 = pneg %p36
        %p181 = pneg %p60
        %p182 = pneg %p57
        %p183 = pneg %p81
        %p184 = pneg %p78
        %p185 = pneg %p102
        %p186 = pneg %p99
        %p187 = pneg %p128
        %p188 = pneg %p125
        %s189 = sand.u32 %s115, 1
        %s190 = scalar_lea.sflag [#allocation3], %s189
        %s191 = sand.u32 %s115, 1
        %s192 = smul.addr %s191, 64
        %s193 = scalar_lea.vmem [#allocation2], %s192
        %s194 = smul.u32 8, %s18
        %p195 = scmp.lt.s32.totalorder %s194, 15
        %s196 = scalar_select %p195, %s194, 15
        %s197 = smul.addr %s196, 2
        %s198 = smul.addr %s197, 8
        %s199 = scalar_lea.vmem %s0, %s198
        %s200 = smul.u32 8, %s18
        %s201 = smul.u32 8, %s18
        %v203 = vld [vmem:[%s199] sm:$0xff]
        %v204 = vld [vmem:[%s199 + $0x8] sm:$0xff]
        %v205 = vld [vmem:[%s199 + $0x10] sm:$0xff]
        %v206 = vld [vmem:[%s199 + $0x18] sm:$0xff]
        %v207 = vld [vmem:[%s199 + $0x20] sm:$0xff]
        %v208 = vld [vmem:[%s199 + $0x28] sm:$0xff]
        %v209 = vld [vmem:[%s199 + $0x30] sm:$0xff]
        %v210 = vld [vmem:[%s199 + $0x38] sm:$0xff]
        %v211 = vld [vmem:[%s199 + $0x40] sm:$0xff]
        %v212 = vld [vmem:[%s199 + $0x48] sm:$0xff]
        %v213 = vld [vmem:[%s199 + $0x50] sm:$0xff]
        %v214 = vld [vmem:[%s199 + $0x58] sm:$0xff]
        %v215 = vld [vmem:[%s199 + $0x60] sm:$0xff]
        %v216 = vld [vmem:[%s199 + $0x68] sm:$0xff]
        %v217 = vld [vmem:[%s199 + $0x70] sm:$0xff]
        %v218 = vld [vmem:[%s199 + $0x78] sm:$0xff]
        %v219 = vld [vmem:[%s1] sm:$0x1]
        %v221 = vlaneseq
        %v222 = vshrl.u32 %v221, 7
        %v223 = vsub.s32 0, %v222
        %v224 = vrot.slane %v219, %v223
        %v226 = vmul.f32 %v203, %v224
        %v227 = vmul.f32 %v204, %v224
        %v228 = vmul.f32 %v205, %v224
        %v229 = vmul.f32 %v206, %v224
        %v230 = vmul.f32 %v207, %v224
        %v231 = vmul.f32 %v208, %v224
        %v232 = vmul.f32 %v209, %v224
        %v233 = vmul.f32 %v210, %v224
        %v234 = vmul.f32 %v211, %v224
        %v235 = vmul.f32 %v212, %v224
        %v236 = vmul.f32 %v213, %v224
        %v237 = vmul.f32 %v214, %v224
        %v238 = vmul.f32 %v215, %v224
        %v239 = vmul.f32 %v216, %v224
        %v240 = vmul.f32 %v217, %v224
        %v241 = vmul.f32 %v218, %v224
        %v242 = vld [vmem:[%s2] sm:$0x1]
        %v244 = vlaneseq
        %v245 = vshrl.u32 %v244, 7
        %v246 = vsub.s32 0, %v245
        %v247 = vrot.slane %v242, %v246
        %v249 = vadd.f32 %v226, %v247
        %v250 = vadd.f32 %v227, %v247
        %v251 = vadd.f32 %v228, %v247
        %v252 = vadd.f32 %v229, %v247
        %v253 = vadd.f32 %v230, %v247
        %v254 = vadd.f32 %v231, %v247
        %v255 = vadd.f32 %v232, %v247
        %v256 = vadd.f32 %v233, %v247
        %v257 = vadd.f32 %v234, %v247
        %v258 = vadd.f32 %v235, %v247
        %v259 = vadd.f32 %v236, %v247
        %v260 = vadd.f32 %v237, %v247
        %v261 = vadd.f32 %v238, %v247
        %v262 = vadd.f32 %v239, %v247
        %v263 = vadd.f32 %v240, %v247
        %v264 = vadd.f32 %v241, %v247
        %v265 = vmax.f32 %v249, 0.0
        %v266 = vmax.f32 %v250, 0.0
        %v267 = vmax.f32 %v251, 0.0
        %v268 = vmax.f32 %v252, 0.0
        %v269 = vmax.f32 %v253, 0.0
        %v270 = vmax.f32 %v254, 0.0
        %v271 = vmax.f32 %v255, 0.0
        %v272 = vmax.f32 %v256, 0.0
        %v273 = vmax.f32 %v257, 0.0
        %v274 = vmax.f32 %v258, 0.0
        %v275 = vmax.f32 %v259, 0.0
        %v276 = vmax.f32 %v260, 0.0
        %v277 = vmax.f32 %v261, 0.0
        %v278 = vmax.f32 %v262, 0.0
        %v279 = vmax.f32 %v263, 0.0
        %v280 = vmax.f32 %v264, 0.0
        %v281 = vadd.f32 %v265, %v266
        %v282 = vadd.f32 %v267, %v268
        %v283 = vadd.f32 %v269, %v270
        %v284 = vadd.f32 %v271, %v272
        %v285 = vadd.f32 %v273, %v274
        %v286 = vadd.f32 %v275, %v276
        %v287 = vadd.f32 %v277, %v278
        %v288 = vadd.f32 %v279, %v280
        %v289 = vpack.c.bf16 %v282, %v281
        %v290 = vpack.c.bf16 %v284, %v283
        %v291 = vpack.c.bf16 %v286, %v285
        %v292 = vpack.c.bf16 %v288, %v287
        %v293 = vld [vmem:[%s3] sm:$0xf]
        %vm294 = vcmask 64512
        %v296 = vsel %vm294, %v289, 0
        %v299 = vsel %vm294, %v290, 0
        %v302 = vsel %vm294, %v291, 0
        %v305 = vsel %vm294, %v292, 0
        %vm307 = vcmask 1043456
        %v309 = vsel %vm307, %v293, 0
        %311 = vmatprep.subr.bf16.mxu0 0
        %312 = vmatpush1.bf16.msra.mxu0 %v309
        %313 = vmatprep.subr.bf16.mxu0 0
        %314 = vmatpush1.bf16.msra.mxu0 0
        %315 = vmatprep.subr.bf16.mxu0 0
        %316 = vmatpush1.bf16.msra.mxu0 0
        %317 = vmatprep.subr.bf16.mxu0 0
        %318 = vmatpush1.bf16.msra.mxu0 0
        %319 = vmatprep.subr.bf16.mxu0 0
        %320 = vmatpush1.bf16.msra.mxu0 0
        %321 = vmatprep.subr.bf16.mxu0 0
        %322 = vmatpush1.bf16.msra.mxu0 0
        %323 = vmatprep.subr.bf16.mxu0 0
        %324 = vmatpush1.bf16.msra.mxu0 0
        %325 = vmatprep.subr.bf16.mxu0 0
        %326 = vmatpush1.bf16.msra.mxu0 0
        %327 = vmatprep.subr.bf16.mxu0 0
        %328 = vmatpush1.bf16.msra.mxu0 0
        %329 = vmatprep.subr.bf16.mxu0 0
        %330 = vmatpush1.bf16.msra.mxu0 0
        %331 = vmatprep.subr.bf16.mxu0 0
        %332 = vmatpush1.bf16.msra.mxu0 0
        %333 = vmatprep.subr.bf16.mxu0 0
        %334 = vmatpush1.bf16.msra.mxu0 0
        %335 = vmatprep.subr.bf16.mxu0 0
        %336 = vmatpush1.bf16.msra.mxu0 0
        %337 = vmatprep.subr.bf16.mxu0 0
        %338 = vmatpush1.bf16.msra.mxu0 0
        %339 = vmatprep.subr.bf16.mxu0 0
        %340 = vmatpush1.bf16.msra.mxu0 0
        %341 = vmatprep.subr.bf16.mxu0 0
        %342 = vmatpush1.bf16.msra.mxu0 0
        %343 = vmatprep.mubr.bf16.mxu0 0
        %344 = vmatmul.mubr.bf16.gmra.mrb[0].mxu0 %v296
        %v345 = vpop.f32.mrb[0].mxu0
        %v346 = vadd.f32 0.0, %v345
        %v347 = vpop.f32.mrb[0].mxu0
        %v348 = vpop.f32.mrb[0].mxu0
        %v349 = vadd.f32 0.0, %v348
        %v350 = vpop.f32.mrb[0].mxu0
        %351 = vmatprep.mubr.bf16.mxu0 0
        %352 = vmatmul.mubr.bf16.gmra.mrb[0].mxu0 %v299
        %v353 = vpop.f32.mrb[0].mxu0
        %v354 = vadd.f32 0.0, %v353
        %v355 = vpop.f32.mrb[0].mxu0
        %v356 = vpop.f32.mrb[0].mxu0
        %v357 = vadd.f32 0.0, %v356
        %v358 = vpop.f32.mrb[0].mxu0
        %359 = vmatprep.mubr.bf16.mxu0 0
        %360 = vmatmul.mubr.bf16.gmra.mrb[0].mxu0 %v302
        %v361 = vpop.f32.mrb[0].mxu0
        %v362 = vadd.f32 0.0, %v361
        %v363 = vpop.f32.mrb[0].mxu0
        %v364 = vpop.f32.mrb[0].mxu0
        %v365 = vadd.f32 0.0, %v364
        %v366 = vpop.f32.mrb[0].mxu0
        %367 = vmatprep.mubr.bf16.mxu0 0
        %368 = vmatmul.mubr.bf16.gmra.mrb[0].mxu0 %v305
        %v369 = vpop.f32.mrb[0].mxu0
        %v370 = vadd.f32 0.0, %v369
        %v371 = vpop.f32.mrb[0].mxu0
        %v372 = vpop.f32.mrb[0].mxu0
        %v373 = vadd.f32 0.0, %v372
        %v374 = vpop.f32.mrb[0].mxu0
        %375 = vdwg.mxu0
        %376 = vst.msk [vmem:[%s193] sm:$0xff] %vm294, %v346
        %377 = vst.msk [vmem:[%s193 + $0x8] sm:$0xff] %vm294, %v349
        %378 = vst.msk [vmem:[%s193 + $0x10] sm:$0xff] %vm294, %v354
        %379 = vst.msk [vmem:[%s193 + $0x18] sm:$0xff] %vm294, %v357
        %380 = vst.msk [vmem:[%s193 + $0x20] sm:$0xff] %vm294, %v362
        %381 = vst.msk [vmem:[%s193 + $0x28] sm:$0xff] %vm294, %v365
        %382 = vst.msk [vmem:[%s193 + $0x30] sm:$0xff] %vm294, %v370
        %383 = vst.msk [vmem:[%s193 + $0x38] sm:$0xff] %vm294, %v373
        %s384 = sand.u32 %s115, 1
        %s385 = scalar_lea.sflag [#allocation3], %s384
        %s386 = sand.u32 %s115, 1
        %s387 = smul.addr %s386, 64
        %s388 = scalar_lea.vmem [#allocation2], %s387
        // Predicated region
        $region37: #{transition_block_nhwc.1} parent=35 // pred_check
          %p389 = pneg %p125
        $region38: #{transition_block_nhwc.1} parent=35 // pred_check_branch
          %391 = sbr.rel (%p389) target = $region40
        $region39: #{transition_block_nhwc.1} parent=35 // pred_region
          %s392 = smul.u32 8, %s18
          %s394 = ssub.s32 1024, 1024
          %395 = vsyncadd %s385, %s394
          %s396 = smul.addr %s392, 128
          %s397 = scalar_lea.hbm %s4, %s396
          %s398 = sshll.u32 %s388, 4
          %s399 = int_to_ptr.vmem [resolvable:$true] %s398
          %404 = dma.vmem_to_hbm [thread:$0]  %s399, 1024, %s397, %s385, 128, 128, 8
        $region40: #{transition_block_nhwc.1} parent=35 // pred_fallthru
          _
      $region36: #{transition_block_nhwc.1} parent=5 // pred_fallthru
        _
      %p405 = scmp.le.s32.totalorder 2, %s13
      // Predicated region
      $region41: #{transition_block_nhwc.1} parent=5 // pred_check
        %p406 = pneg %p405
      $region42: #{transition_block_nhwc.1} parent=5 // pred_check_branch
        %408 = sbr.rel (%p406) target = $region44
      $region43: #{transition_block_nhwc.1} parent=5 // pred_region
        %s409 = ssub.s32 %s13, 2
        // Predicated region
        $region45: #{transition_block_nhwc.1} parent=43 // pred_check
          %p410 = pneg %p131
        $region46: #{transition_block_nhwc.1} parent=43 // pred_check_branch
          %412 = sbr.rel (%p410) target = $region48
        $region47: #{transition_block_nhwc.1} parent=43 // pred_region
          %s413 = sand.u32 %s116, 1
          %s414 = scalar_lea.sflag [#allocation3], %s413
          %s415 = sand.u32 %s116, 1
          %s416 = smul.addr %s415, 64
          %s417 = scalar_lea.vmem [#allocation2], %s416
          %418 = dma.done %s414, 1024
        $region48: #{transition_block_nhwc.1} parent=43 // pred_fallthru
          _
      $region44: #{transition_block_nhwc.1} parent=5 // pred_fallthru
        _
    $region6: #{transition_block_nhwc.1} parent=1 // loop_footer
      %s17 = sadd.s32 1, %s13
    $region7: #{transition_block_nhwc.1} parent=1 // loop_footer_branch
      %12 = sbr.rel target = $region3
    $region8: #{transition_block_nhwc.1} parent=1 // loop_exit
      _
    %419 = vsyncpa [#allocation3], 1
    %s420 = scalar_lea.sflag [#allocation3], 1
    %421 = vsyncpa %s420, 1

</llo_original>
